<compile_context>
chip_gen: v7x
topology: tpu7x:2x2x1
jax: 0.10.0
libtpu: 0.0.40
codegen_flags: <defaults>
</compile_context>

<pallas_src>
import functools

import jax
import jax.numpy as jnp
from jax import lax
from jax.experimental import pallas as pl
from jax.experimental.pallas import tpu as pltpu


# --------------------------------------------------------------------------
# Kernels
# --------------------------------------------------------------------------

def _sbn_kernel(x_ref, w_ref, b_ref, o_ref, stat_ref, *, eps, sum_size):
    # x_ref : (N, C_tile, HW)   w_ref, b_ref : (C_tile, 1)  (f32)
    # o_ref : (N, C_tile, HW)   stat_ref : (C_tile, 2)  [sum, ssum] per channel
    #
    # Read x_ref directly in each expression (no bound whole-tile f32 copy):
    # sub-32-bit upcasts stay fused per-vreg.
    s = jnp.sum(x_ref[...], axis=(0, 2), dtype=jnp.float32, keepdims=True)   # (1,Ct,1)
    ss = jnp.sum(jnp.square(x_ref[...].astype(jnp.float32)),
                 axis=(0, 2), keepdims=True)                                 # (1,Ct,1)

    mean = s / sum_size
    # E[x^2] - E[x]^2, same formulation as the PyTorch module
    # (_compute_mean_std: sumvar = ssum - sum*mean).  Clamp cancellation-born
    # negatives so rsqrt can never return NaN.
    bias_var = jnp.maximum(ss / sum_size - mean * mean, 0.0)
    inv_std = lax.rsqrt(bias_var + eps)

    w = w_ref[...][None, :, :]                 # (1, Ct, 1), already f32
    b = b_ref[...][None, :, :]
    scale = inv_std * w
    shift = b - mean * scale

    # Single fused multiply-add per element.
    o_ref[...] = (x_ref[...].astype(jnp.float32) * scale + shift).astype(o_ref.dtype)

    # Merged per-channel stats -> one small (Ct,2) writeback per grid step.
    stat_ref[:, 0:1] = s[0]
    stat_ref[:, 1:2] = ss[0]


def _sbn_stats_kernel(x_ref, stat_ref):
    # Two-pass fallback, pass 1.
    # x_ref : (N_tile, C_tile, HW)   stat_ref : (C_tile, 2) accumulator
    # Grid = (channel tiles, batch tiles); the stat block index is constant
    # along the batch axis, so the output stays VMEM-resident and accumulates.
    @pl.when(pl.program_id(1) == 0)
    def _():
        stat_ref[...] = jnp.zeros_like(stat_ref)

    s = jnp.sum(x_ref[...], axis=(0, 2), dtype=jnp.float32, keepdims=True)[0]   # (Ct,1)
    ss = jnp.sum(jnp.square(x_ref[...].astype(jnp.float32)),
                 axis=(0, 2), keepdims=True)[0]                                 # (Ct,1)
    stat_ref[:, 0:1] += s
    stat_ref[:, 1:2] += ss


def _sbn_norm_kernel(x_ref, scale_ref, shift_ref, o_ref):
    # Elementwise normalize with precomputed per-channel scale/shift (f32).
    # x_ref/o_ref : (N_tile, C_tile, HW); scale_ref/shift_ref : (C_tile, 1).
    scale = scale_ref[...][None, :, :]
    shift = shift_ref[...][None, :, :]
    o_ref[...] = (x_ref[...].astype(jnp.float32) * scale + shift).astype(o_ref.dtype)


# --------------------------------------------------------------------------
# Tiling helpers
# --------------------------------------------------------------------------

def _sublane_multiple(dtype):
    """Packed sublane granule: 8 for 32-bit, 16 for 16-bit, 32 for 8-bit."""
    isz = jnp.dtype(dtype).itemsize
    if isz >= 4:
        return 8
    if isz == 2:
        return 16
    return 32


def _vmem_budgets():
    """(per-block tile budget bytes, vmem_limit_bytes) — generation aware.

    128-MiB-VMEM parts (v5e/v6e): ~10 MiB slabs, 96 MiB scoped limit (fewer
    grid steps / longer contiguous DMAs).  64-MiB parts (v7x per TensorCore)
    and unknown chips: conservative 4 MiB slabs, 48 MiB limit.
    """
    cap = None
    try:
        cap = int(pltpu.get_tpu_info().vmem_capacity_bytes)
    except Exception:
        cap = None
    if cap is not None and cap >= 96 * 1024 * 1024:
        return 10 * 1024 * 1024, min(96 * 1024 * 1024, (cap * 3) // 4)
    return 4 * 1024 * 1024, 48 * 1024 * 1024


def _pick_c_tile(C, N, HW, itemsize, budget, sub):
    """Channel tile for the single-pass kernel.

    Multiple of the packed sublane granule (or full C when C <= granule),
    capped so the (N, c_tile, HW) slab stays within the per-buffer budget, and
    small enough to target ~4 grid steps so BlockSpec pipelining overlaps
    compute/writeback with the next input DMA and v7x can shard the channel
    axis across both TensorCores.
    """
    if C <= sub:
        return C
    per_c = N * HW * itemsize
    max_c = (budget // per_c) // sub * sub          # >= sub: caller checked fit
    target = -(-C // 4)                             # cdiv(C, 4): aim for ~4 steps
    target = -(-target // sub) * sub                # round up to the granule
    return max(sub, min(max_c, target))


def _pick_n_tile(N, per_n_bytes, budget):
    """Largest divisor of N whose (n_tile, c_tile, HW) slab fits the budget."""
    best = 1
    for d in range(1, N + 1):
        if N % d == 0 and d * per_n_bytes <= budget:
            best = d
    return best


def _run_normalize(x3d, scale_c, shift_c, c_tile, n_tile, vmem_limit):
    """Elementwise normalize pass, tiled over (channel, batch)."""
    N, C, HW = x3d.shape
    grid = (pl.cdiv(C, c_tile), N // n_tile)
    return pl.pallas_call(
        _sbn_norm_kernel,
        out_shape=jax.ShapeDtypeStruct((N, C, HW), x3d.dtype),
        grid=grid,
        in_specs=[
            pl.BlockSpec((n_tile, c_tile, HW), lambda i, j: (j, i, 0)),
            pl.BlockSpec((c_tile, 1), lambda i, j: (i, 0)),
            pl.BlockSpec((c_tile, 1), lambda i, j: (i, 0)),
        ],
        out_specs=pl.BlockSpec((n_tile, c_tile, HW), lambda i, j: (j, i, 0)),
        compiler_params=pltpu.CompilerParams(
            dimension_semantics=("parallel", "parallel"),
            vmem_limit_bytes=vmem_limit,
        ),
    )(x3d, scale_c, shift_c)


# --------------------------------------------------------------------------
# Forward wrapper
# --------------------------------------------------------------------------

def synchronized_batch_norm(x_nchw, weight, bias, running_mean, running_var,
                            *, eps=1e-5, momentum=0.0003, training=True,
                            _tile_budget_bytes=None):
    """x_nchw: (N, C, H, W).  Returns (out_nchw, new_running_mean, new_running_var)."""
    N, C, H, W = x_nchw.shape
    HW = H * W
    L = N * HW
    itemsize = jnp.dtype(x_nchw.dtype).itemsize
    sub = _sublane_multiple(x_nchw.dtype)

    if weight is None:          # affine=False
        weight = jnp.ones((C,), jnp.float32)
    if bias is None:
        bias = jnp.zeros((C,), jnp.float32)

    budget, vmem_limit = _vmem_budgets()
    if _tile_budget_bytes is not None:
        budget = int(_tile_budget_bytes)

    # Free reshape: HW stays the contiguous (lane-dense) last axis; no transpose.
    # TODO(synk): for late-CNN feature maps with H*W < 128 a one-time
    # (C, N*H*W) relayout would make the stores lane-dense; skipped here since
    # it costs an extra HBM pass over x.
    x3d = x_nchw.reshape(N, C, HW)
    w2d = weight.astype(jnp.float32).reshape(C, 1)
    b2d = bias.astype(jnp.float32).reshape(C, 1)

    c_min = C if C <= sub else sub
    single_pass = N * HW * c_min * itemsize <= budget
    if single_pass:
        c_tile = _pick_c_tile(C, N, HW, itemsize, budget, sub)
        n_tile = N
    else:
        # Two-pass fallback tiles: smallest legal channel tile, then as many
        # batch rows as fit the budget.
        c_tile = C if C <= 8 else (sub if C >= sub else 8)
        n_tile = _pick_n_tile(N, c_tile * HW * itemsize, budget)
        # TODO(synk): if even (1, c_tile, HW) exceeds the budget (H*W beyond
        # ~360x360 for f32), tile the HW axis as well.

    if not training:
        # Eval mode (F.batch_norm training=False): normalize with the running
        # statistics; running stats are not updated.
        rv_f = running_var.astype(jnp.float32)
        rm_f = running_mean.astype(jnp.float32)
        inv_std_c = lax.rsqrt(rv_f + eps)
        scale_1d = inv_std_c * w2d[:, 0]
        shift_1d = b2d[:, 0] - rm_f * scale_1d
        out3d = _run_normalize(x3d, scale_1d.reshape(C, 1), shift_1d.reshape(C, 1),
                               c_tile, n_tile, vmem_limit)
        return out3d.reshape(N, C, H, W), running_mean, running_var

    if single_pass:
        kernel = functools.partial(_sbn_kernel, eps=float(eps), sum_size=float(L))
        out3d, stat = pl.pallas_call(
            kernel,
            out_shape=(
                jax.ShapeDtypeStruct((N, C, HW), x_nchw.dtype),
                jax.ShapeDtypeStruct((C, 2), jnp.float32),
            ),
            grid=(pl.cdiv(C, c_tile),),
            in_specs=[
                pl.BlockSpec((N, c_tile, HW), lambda i: (0, i, 0)),
                pl.BlockSpec((c_tile, 1), lambda i: (i, 0)),
                pl.BlockSpec((c_tile, 1), lambda i: (i, 0)),
            ],
            out_specs=(
                pl.BlockSpec((N, c_tile, HW), lambda i: (0, i, 0)),
                pl.BlockSpec((c_tile, 2), lambda i: (i, 0)),
            ),
            compiler_params=pltpu.CompilerParams(
                dimension_semantics=("parallel",),
                vmem_limit_bytes=vmem_limit,
            ),
        )(x3d, w2d, b2d)
    else:
        # Pass 1: per-channel sum / sum-of-squares, accumulated over batch tiles.
        stat = pl.pallas_call(
            _sbn_stats_kernel,
            out_shape=jax.ShapeDtypeStruct((C, 2), jnp.float32),
            grid=(pl.cdiv(C, c_tile), N // n_tile),
            in_specs=[pl.BlockSpec((n_tile, c_tile, HW), lambda i, j: (j, i, 0))],
            out_specs=pl.BlockSpec((c_tile, 2), lambda i, j: (i, 0)),
            compiler_params=pltpu.CompilerParams(
                dimension_semantics=("parallel", "arbitrary"),
                vmem_limit_bytes=vmem_limit,
            ),
        )(x3d)
        # O(C) glue: per-channel scale/shift from the accumulated stats.
        s_c = stat[:, 0]
        ss_c = stat[:, 1]
        mean_c = s_c / L
        bias_var_c = jnp.maximum(ss_c / L - mean_c * mean_c, 0.0)
        inv_std_c = lax.rsqrt(bias_var_c + eps)
        scale_1d = inv_std_c * w2d[:, 0]
        shift_1d = b2d[:, 0] - mean_c * scale_1d
        # Pass 2: elementwise normalize.
        out3d = _run_normalize(x3d, scale_1d.reshape(C, 1), shift_1d.reshape(C, 1),
                               c_tile, n_tile, vmem_limit)

    out_nchw = out3d.reshape(N, C, H, W)

    # Running-stat EMA from the kernel's per-channel sums — O(C) glue, no
    # re-read of x.  F.batch_norm / the sync module use the UNbiased variance.
    s_c = stat[:, 0]
    ss_c = stat[:, 1]
    mean_c = s_c / L
    sumvar = jnp.maximum(ss_c - s_c * mean_c, 0.0)
    unbias_var = sumvar / max(L - 1, 1)        # guard degenerate N*H*W == 1
    new_rm = (1.0 - momentum) * running_mean + momentum * mean_c
    new_rv = (1.0 - momentum) * running_var + momentum * unbias_var
    return out_nchw, new_rm, new_rv


# --------------------------------------------------------------------------
# Self-test
# --------------------------------------------------------------------------

if __name__ == "__main__":
    key = jax.random.PRNGKey(0)
    eps, momentum = 1e-5, 0.0003

    def reference(x, weight, bias, rm, rv):
        N, C, H, W = x.shape
        L = N * H * W
        mean = jnp.mean(x, axis=(0, 2, 3))
        var_b = jnp.mean((x - mean.reshape(1, C, 1, 1)) ** 2, axis=(0, 2, 3))
        out = (x - mean.reshape(1, C, 1, 1)) * lax.rsqrt(var_b.reshape(1, C, 1, 1) + eps) \
            * weight.reshape(1, C, 1, 1) + bias.reshape(1, C, 1, 1)
        var_u = var_b * (L / (L - 1))
        rm_new = (1.0 - momentum) * rm + momentum * mean
        rv_new = (1.0 - momentum) * rv + momentum * var_u
        return out, rm_new, rv_new

    def check(shape, tile_budget=None):
        N, C, H, W = shape
        x = jax.random.normal(jax.random.fold_in(key, C * H), shape, dtype=jnp.float32)
        # Parameters as in _NormBase.reset_parameters(): weight=1, bias=0,
        # running_mean=0, running_var=1.
        weight = jnp.ones((C,), jnp.float32)
        bias = jnp.zeros((C,), jnp.float32)
        rm = jnp.zeros((C,), jnp.float32)
        rv = jnp.ones((C,), jnp.float32)
        out, new_rm, new_rv = synchronized_batch_norm(
            x, weight, bias, rm, rv, eps=eps, momentum=momentum, training=True,
            _tile_budget_bytes=tile_budget)
        jax.block_until_ready((out, new_rm, new_rv))
        out_ref, rm_ref, rv_ref = reference(x, weight, bias, rm, rv)
        assert float(jnp.max(jnp.abs(out - out_ref))) < 1e-4, f"output mismatch {shape}"
        assert float(jnp.max(jnp.abs(new_rm - rm_ref))) < 1e-5, f"running_mean mismatch {shape}"
        assert float(jnp.max(jnp.abs(new_rv - rv_ref))) < 1e-5, f"running_var mismatch {shape}"

    # 1) Primary shape: single-pass path (channel grid collapses to one tile).
    check((2, 4, 16, 16))
    # 2) Larger channel count with a small tile budget -> multi-step channel
    #    grid in the single-pass kernel (exercises pipelining / tiling).
    check((3, 16, 8, 8), tile_budget=8192)
    # 3) Tiny tile budget -> two-pass fallback (batch-tiled stats accumulation
    #    followed by the normalize pass).
    check((2, 4, 16, 16), tile_budget=1024)

    print("KERNEL_OK")
</pallas_src>

<mosaic_0001>
module attributes {stable_mosaic.version = 11 : i64} {
  func.func @_sbn_kernel(%arg0: i32, %arg1: memref<2x4x256xf32, #tpu.memory_space<vmem>>, %arg2: memref<4x1xf32, #tpu.memory_space<vmem>>, %arg3: memref<4x1xf32, #tpu.memory_space<vmem>>, %arg4: memref<2x4x256xf32, #tpu.memory_space<vmem>>, %arg5: memref<4x2xf32, #tpu.memory_space<vmem>>) attributes {dimension_semantics = [#tpu.dimension_semantics<parallel>], iteration_bounds = array<i64: 1>, scalar_prefetch = 0 : i64, scratch_operands = 0 : i64, tpu.core_type = #tpu.core_type<tc>, window_params = [{transform_indices = @transform_0, window_bounds = array<i64: 2, 4, 256>}, {transform_indices = @transform_1, window_bounds = array<i64: 4, 1>}, {transform_indices = @transform_2, window_bounds = array<i64: 4, 1>}, {transform_indices = @transform_3, window_bounds = array<i64: 2, 4, 256>}, {transform_indices = @transform_4, window_bounds = array<i64: 4, 2>}]} {
    %c0 = arith.constant 0 : index
    %c0_0 = arith.constant 0 : index
    %c0_1 = arith.constant 0 : index
    %0 = vector.load %arg1[%c0, %c0_0, %c0_1] : memref<2x4x256xf32, #tpu.memory_space<vmem>>, vector<2x4x256xf32>
    %cst = arith.constant dense<0.000000e+00> : vector<4xf32>
    %1 = vector.multi_reduction <add>, %0, %cst [0, 2] : vector<2x4x256xf32> to vector<4xf32>
    %2 = vector.shape_cast %1 : vector<4xf32> to vector<1x4x1xf32>
    %c0_2 = arith.constant 0 : index
    %c0_3 = arith.constant 0 : index
    %c0_4 = arith.constant 0 : index
    %3 = vector.load %arg1[%c0_2, %c0_3, %c0_4] : memref<2x4x256xf32, #tpu.memory_space<vmem>>, vector<2x4x256xf32>
    %4 = arith.mulf %3, %3 : vector<2x4x256xf32>
    %cst_5 = arith.constant dense<0.000000e+00> : vector<4xf32>
    %5 = vector.multi_reduction <add>, %4, %cst_5 [0, 2] : vector<2x4x256xf32> to vector<4xf32>
    %6 = vector.shape_cast %5 : vector<4xf32> to vector<1x4x1xf32>
    %cst_6 = arith.constant 5.120000e+02 : f32
    %7 = vector.broadcast %cst_6 : f32 to vector<1x4x1xf32>
    %8 = arith.divf %2, %7 : vector<1x4x1xf32>
    %cst_7 = arith.constant 5.120000e+02 : f32
    %9 = vector.broadcast %cst_7 : f32 to vector<1x4x1xf32>
    %10 = arith.divf %6, %9 : vector<1x4x1xf32>
    %11 = arith.mulf %8, %8 : vector<1x4x1xf32>
    %12 = arith.subf %10, %11 : vector<1x4x1xf32>
    %cst_8 = arith.constant 0.000000e+00 : f32
    %13 = vector.broadcast %cst_8 : f32 to vector<1x4x1xf32>
    %14 = arith.maximumf %12, %13 : vector<1x4x1xf32>
    %cst_9 = arith.constant 9.99999974E-6 : f32
    %15 = vector.broadcast %cst_9 : f32 to vector<1x4x1xf32>
    %16 = arith.addf %14, %15 : vector<1x4x1xf32>
    %17 = math.rsqrt %16 : vector<1x4x1xf32>
    %c0_10 = arith.constant 0 : index
    %c0_11 = arith.constant 0 : index
    %18 = vector.load %arg2[%c0_10, %c0_11] : memref<4x1xf32, #tpu.memory_space<vmem>>, vector<4x1xf32>
    %19 = vector.shape_cast %18 : vector<4x1xf32> to vector<1x4x1xf32>
    %c0_12 = arith.constant 0 : index
    %c0_13 = arith.constant 0 : index
    %20 = vector.load %arg3[%c0_12, %c0_13] : memref<4x1xf32, #tpu.memory_space<vmem>>, vector<4x1xf32>
    %21 = vector.shape_cast %20 : vector<4x1xf32> to vector<1x4x1xf32>
    %22 = arith.mulf %17, %19 : vector<1x4x1xf32>
    %23 = arith.mulf %8, %22 : vector<1x4x1xf32>
    %24 = arith.subf %21, %23 : vector<1x4x1xf32>
    %c0_14 = arith.constant 0 : index
    %c0_15 = arith.constant 0 : index
    %c0_16 = arith.constant 0 : index
    %25 = vector.load %arg1[%c0_14, %c0_15, %c0_16] : memref<2x4x256xf32, #tpu.memory_space<vmem>>, vector<2x4x256xf32>
    %26 = vector.broadcast %22 : vector<1x4x1xf32> to vector<2x4x256xf32>
    %27 = arith.mulf %25, %26 : vector<2x4x256xf32>
    %28 = vector.broadcast %24 : vector<1x4x1xf32> to vector<2x4x256xf32>
    %29 = arith.addf %27, %28 : vector<2x4x256xf32>
    %c0_17 = arith.constant 0 : index
    %c0_18 = arith.constant 0 : index
    %c0_19 = arith.constant 0 : index
    %30 = vector.load %arg4[%c0_17, %c0_18, %c0_19] : memref<2x4x256xf32, #tpu.memory_space<vmem>>, vector<2x4x256xf32>
    tpu.vector_store %arg4[%c0_17, %c0_18, %c0_19], %29 {strides = array<i32>} : memref<2x4x256xf32, #tpu.memory_space<vmem>>, vector<2x4x256xf32>,
    %31 = vector.shape_cast %2 : vector<1x4x1xf32> to vector<4x1xf32>
    %c0_20 = arith.constant 0 : index
    %c0_21 = arith.constant 0 : index
    %32 = vector.load %arg5[%c0_20, %c0_21] : memref<4x2xf32, #tpu.memory_space<vmem>>, vector<4x1xf32>
    tpu.vector_store %arg5[%c0_20, %c0_21], %31 {strides = array<i32>} : memref<4x2xf32, #tpu.memory_space<vmem>>, vector<4x1xf32>,
    %33 = vector.shape_cast %6 : vector<1x4x1xf32> to vector<4x1xf32>
    %c0_22 = arith.constant 0 : index
    %c1 = arith.constant 1 : index
    %34 = vector.load %arg5[%c0_22, %c1] : memref<4x2xf32, #tpu.memory_space<vmem>>, vector<4x1xf32>
    tpu.vector_store %arg5[%c0_22, %c1], %33 {strides = array<i32>} : memref<4x2xf32, #tpu.memory_space<vmem>>, vector<4x1xf32>,
    return
  }
  func.func @transform_0(%arg0: i32) -> (i32, i32, i32) {
    %c0_i32 = arith.constant 0 : i32
    %c0_i32_0 = arith.constant 0 : i32
    %c0_i32_1 = arith.constant 0 : i32
    return %c0_i32, %arg0, %c0_i32_0 : i32, i32, i32
  }
  func.func @transform_1(%arg0: i32) -> (i32, i32) {
    %c0_i32 = arith.constant 0 : i32
    %c0_i32_0 = arith.constant 0 : i32
    return %arg0, %c0_i32 : i32, i32
  }
  func.func @transform_2(%arg0: i32) -> (i32, i32) {
    %c0_i32 = arith.constant 0 : i32
    %c0_i32_0 = arith.constant 0 : i32
    return %arg0, %c0_i32 : i32, i32
  }
  func.func @transform_3(%arg0: i32) -> (i32, i32, i32) {
    %c0_i32 = arith.constant 0 : i32
    %c0_i32_0 = arith.constant 0 : i32
    %c0_i32_1 = arith.constant 0 : i32
    return %c0_i32, %arg0, %c0_i32_0 : i32, i32, i32
  }
  func.func @transform_4(%arg0: i32) -> (i32, i32) {
    %c0_i32 = arith.constant 0 : i32
    %c0_i32_0 = arith.constant 0 : i32
    return %arg0, %c0_i32 : i32, i32
  }
}

</mosaic_0001>

<llo_original>
// kernel: tpu_custom_call.1
$region0: #{tpu_custom_call.1}
  #allocation0 [shape = 'u32[]', space=smem, size = 0x4, offset = 0x4, fixed_abs, tag = 'smem constant byte address 0x4 - core index']
  #allocation1 [shape = 'u32[144,128]{1,0:T(1,128)}', space=vmem, size = 0x12000, scoped, tag = 'internal scratch']
  %s0 = inlined_call_operand.hbm [shape: f32[2,4,256], index: 0, kind: input, shape index: {}]
  %s1 = inlined_call_operand.vmem [shape: f32[4,1], index: 1, kind: input, shape index: {}]
  %s2 = inlined_call_operand.vmem [shape: f32[4,1], index: 2, kind: input, shape index: {}]
  %s3 = inlined_call_operand.hbm [shape: f32[2,4,256], index: 3, kind: output, shape index: {0}]
  %s4 = inlined_call_operand.vmem [shape: f32[4,2], index: 4, kind: output, shape index: {1}]
  %5 = xla_tuple %s3, %s4
  %s6 = sld [smem:[#allocation0]]
  $region34: #{tpu_custom_call.1} parent=0
    _
  %s8 = ssub.s32 1, %s6
  %s9 = scalar_select 0, %s8, %s6
  $region1: #{tpu_custom_call.1} parent=0
    #allocation2 [shape = 'u8[8192]{0}', space=vmem, size = 0x2000, scoped, tag = 'input window, operand 0, single buffered']
    #allocation3 [shape = 's32[1]{0}', space=sflag, size = 0x4, scoped, tag = 'scoped memory for tpu_custom_call.1']
    #allocation4 [shape = 's32[1]{0}', space=sflag, size = 0x4, scoped, tag = 'scoped memory for tpu_custom_call.1']
    #allocation5 [shape = 'u8[8192]{0}', space=vmem, size = 0x2000, scoped, tag = 'output window, operand 0, single buffered']
    %10 = vsyncpa [#allocation3], 0
    %11 = vsyncpa [#allocation4], 0
    // Predicated region
    $region2: #{tpu_custom_call.1} parent=1 // pred_check
      _
    $region3: #{tpu_custom_call.1} parent=1 // pred_check_branch
      %13 = sbr.rel (0) target = $region5
    $region4: #{tpu_custom_call.1} parent=1 // pred_region
      %s15 = ssub.s32 256, 256
      %16 = vsyncadd [#allocation3], %s15
      %s17 = sshll.u32 [#allocation2], 4
      %s18 = int_to_ptr.vmem [resolvable:$true] %s17
      %23 = dma.hbm_to_vmem [thread:$0]  %s0, 256, %s18, [#allocation3], 128, 128, 8
    $region5: #{tpu_custom_call.1} parent=1 // pred_fallthru
      _
    // Predicated region
    $region6: #{tpu_custom_call.1} parent=1 // pred_check
      _
    $region7: #{tpu_custom_call.1} parent=1 // pred_check_branch
      %25 = sbr.rel (0) target = $region9
    $region8: #{tpu_custom_call.1} parent=1 // pred_region
      _
    $region9: #{tpu_custom_call.1} parent=1 // pred_fallthru
      _
    // Predicated region
    $region10: #{tpu_custom_call.1} parent=1 // pred_check
      _
    $region11: #{tpu_custom_call.1} parent=1 // pred_check_branch
      %27 = sbr.rel (0) target = $region13
    $region12: #{tpu_custom_call.1} parent=1 // pred_region
      _
    $region13: #{tpu_custom_call.1} parent=1 // pred_fallthru
      _
    // Predicated region
    $region14: #{tpu_custom_call.1} parent=1 // pred_check
      _
    $region15: #{tpu_custom_call.1} parent=1 // pred_check_branch
      %29 = sbr.rel (0) target = $region17
    $region16: #{tpu_custom_call.1} parent=1 // pred_region
      %30 = dma.done [#allocation3], 256
    $region17: #{tpu_custom_call.1} parent=1 // pred_fallthru
      _
    %v31 = vld [vmem:[#allocation2] sm:$0xff]
    %v32 = vld [vmem:[#allocation2 + $0x8] sm:$0xff]
    %v35 = vcombine.high %v31, %v31
    %v36 = vcombine.high %v32, %v32
    %vm39 = vcmask 1043456
    %v40 = vsel %vm39, %v31, 0.0
    %v41 = vsel %vm39, %v35, 0.0
    %v42 = vadd.f32 %v40, %v41
    %v43 = vsel %vm39, %v32, 0.0
    %v44 = vadd.f32 %v42, %v43
    %v45 = vsel %vm39, %v36, 0.0
    %v46 = vadd.f32 %v44, %v45
    %47 = vadd.xlane.f32.xlu0 %v46
    %v48 = vpop.xlane.xlu0 %47
    %v49 = vmul.f32 %v31, %v31
    %v50 = vmul.f32 %v32, %v32
    %v53 = vcombine.high %v49, %v49
    %v54 = vcombine.high %v50, %v50
    %v57 = vsel %vm39, %v49, 0.0
    %v58 = vsel %vm39, %v53, 0.0
    %v59 = vadd.f32 %v57, %v58
    %v60 = vsel %vm39, %v50, 0.0
    %v61 = vadd.f32 %v59, %v60
    %v62 = vsel %vm39, %v54, 0.0
    %v63 = vadd.f32 %v61, %v62
    %64 = vadd.xlane.f32.xlu0 %v63
    %v65 = vpop.xlane.xlu0 %64
    %v66 = vrcp.pop 512.0
    %v67 = vmul.f32 %v48, %v66
    %v68 = vmul.f32 %v65, %v66
    %v69 = vmul.f32 %v67, %v67
    %v70 = vsub.f32 %v68, %v69
    %v71 = vmax.f32 %v70, 0.0
    %v72 = vadd.f32 %v71, 1e-05
    %v73 = vrsqrt.pop %v72
    %v74 = vld [vmem:[%s1] sm:$0xf]
    %v75 = vld [vmem:[%s2] sm:$0xf]
    %v76 = vmul.f32 %v73, %v74
    %v77 = vmul.f32 %v67, %v76
    %v78 = vsub.f32 %v75, %v77
    %80 = vset.pattern.permute.xlu0 0
    %81 = vperm.xlu0 %80, %v76
    %v82 = vpop.permute.xlu0 %81
    %v84 = vunpack.c.l.s4 839922192
    %v85 = vunpack.c.0.s8 %v84
    %v86 = vlaneseq
    %v87 = vshrl.u32 %v86, 7
    %v88 = vsub.s32 %v85, %v87
    %v89 = vrot.slane %v82, %v88
    %v91 = vmul.f32 %v31, %v89
    %v92 = vmul.f32 %v32, %v89
    %94 = vset.pattern.permute.xlu0 0
    %95 = vperm.xlu0 %94, %v78
    %v96 = vpop.permute.xlu0 %95
    %v98 = vunpack.c.l.s4 839922192
    %v99 = vunpack.c.0.s8 %v98
    %v100 = vlaneseq
    %v101 = vshrl.u32 %v100, 7
    %v102 = vsub.s32 %v99, %v101
    %v103 = vrot.slane %v96, %v102
    %v105 = vadd.f32 %v91, %v103
    %v106 = vadd.f32 %v92, %v103
    %107 = vst [vmem:[#allocation5] sm:$0xff] %v105
    %108 = vst [vmem:[#allocation5 + $0x8] sm:$0xff] %v106
    %vm109 = vcmask 3072
    %110 = vst.msk [vmem:[%s4] sm:$0xf] %vm109, %v48
    %vm111 = vcmask 11272
    %112 = vst.msk [vmem:[%s4] sm:$0xf] %vm111, %v65
    // Predicated region
    $region18: #{tpu_custom_call.1} parent=1 // pred_check
      _
    $region19: #{tpu_custom_call.1} parent=1 // pred_check_branch
      %114 = sbr.rel (0) target = $region21
    $region20: #{tpu_custom_call.1} parent=1 // pred_region
      %s116 = ssub.s32 256, 256
      %117 = vsyncadd [#allocation4], %s116
      %s118 = sshll.u32 [#allocation5], 4
      %s119 = int_to_ptr.vmem [resolvable:$true] %s118
      %124 = dma.vmem_to_hbm [thread:$0]  %s119, 256, %s3, [#allocation4], 128, 128, 8
    $region21: #{tpu_custom_call.1} parent=1 // pred_fallthru
      _
    // Predicated region
    $region22: #{tpu_custom_call.1} parent=1 // pred_check
      _
    $region23: #{tpu_custom_call.1} parent=1 // pred_check_branch
      %126 = sbr.rel (0) target = $region25
    $region24: #{tpu_custom_call.1} parent=1 // pred_region
      _
    $region25: #{tpu_custom_call.1} parent=1 // pred_fallthru
      _
    // Predicated region
    $region26: #{tpu_custom_call.1} parent=1 // pred_check
      _
    $region27: #{tpu_custom_call.1} parent=1 // pred_check_branch
      %128 = sbr.rel (0) target = $region29
    $region28: #{tpu_custom_call.1} parent=1 // pred_region
      %129 = dma.done [#allocation4], 256
    $region29: #{tpu_custom_call.1} parent=1 // pred_fallthru
      _
    // Predicated region
    $region30: #{tpu_custom_call.1} parent=1 // pred_check
      _
    $region31: #{tpu_custom_call.1} parent=1 // pred_check_branch
      %131 = sbr.rel (0) target = $region33
    $region32: #{tpu_custom_call.1} parent=1 // pred_region
      _
    $region33: #{tpu_custom_call.1} parent=1 // pred_fallthru
      _
    %132 = vsyncpa [#allocation3], 1
    %133 = vsyncpa [#allocation4], 1

</llo_original>
